<compile_context>
chip_gen: v7x
topology: tpu7x:2x2x1
jax: 0.10.0
libtpu: 0.0.40
codegen_flags: <defaults>
</compile_context>

<pallas_src>
import functools

import jax
import jax.numpy as jnp
import numpy as np
from jax.experimental import pallas as pl
from jax.experimental.pallas import tpu as pltpu


# ---------------------------------------------------------------------------
# Kernel 1 (runs once): batch-invariant A = softmax(emb·Wq (emb·Wk)^T / sqrt(D)),
# fused Q|K projection, exact softmax divide, bf16 output.
# ---------------------------------------------------------------------------
def _attn_matrix_kernel(emb_ref, wqk_ref, bqk_ref, a_ref, *, model_dim, mxu_dtype):
    emb = emb_ref[...].astype(mxu_dtype)                        # (S, E)
    # Fused Q|K projection: (S, E) @ (E, 2D) -> (S, 2D), f32 accumulate + f32 bias.
    qk = jnp.dot(emb, wqk_ref[...], preferred_element_type=jnp.float32) + bqk_ref[...]
    q = qk[:, :model_dim]
    k = qk[:, model_dim:]

    scale = 1.0 / float(model_dim) ** 0.5
    # Contract on K's last dim directly (no explicit k.T / relayout).
    scores = jax.lax.dot_general(
        q.astype(mxu_dtype), k.astype(mxu_dtype),
        dimension_numbers=(((1,), (1,)), ((), ())),
        preferred_element_type=jnp.float32,
    ) * scale

    scores = scores - jnp.max(scores, axis=-1, keepdims=True)
    p = jnp.exp(scores)
    # Exact divide: run-once kernel, and row sums == 1 keeps the Wvo/bias fold exact.
    a = p / jnp.sum(p, axis=-1, keepdims=True)
    a_ref[...] = a.astype(a_ref.dtype)                          # bf16 write


# ---------------------------------------------------------------------------
# Kernel 2 (per row-block = batch_block*S flattened rows):
#   V' = x@Wvo, attn = A@V' (per batch, into scratch) + b_fold,
#   residual+LN1, F-chunked FF (ReLU), residual+LN2.
# ---------------------------------------------------------------------------
def _layer_kernel(
    x_ref, a_ref,
    wvo_ref, bvo_ref,
    g1_ref, beta1_ref,
    w1_ref, b1_ref, w2_ref, b2_ref,
    g2_ref, beta2_ref,
    o_ref, attn_ref,
    *, seq_len, batch_block, ff_chunk, mxu_dtype,
):
    eps = 1e-5
    x = x_ref[...]                                              # (R, D) f32
    a = a_ref[...]                                              # (S, S) bf16, batch-invariant

    # V' = x @ (Wv@Wo): one big MXU call over the whole flattened slab.
    v = jnp.dot(x.astype(mxu_dtype), wvo_ref[...],
                preferred_element_type=jnp.float32).astype(mxu_dtype)

    # attn = A @ V' per batch element; write into VMEM scratch (no concatenate copies).
    for b in range(batch_block):
        attn_ref[b * seq_len:(b + 1) * seq_len, :] = jnp.dot(
            a, v[b * seq_len:(b + 1) * seq_len, :],
            preferred_element_type=jnp.float32)

    # ---- residual + LayerNorm 1 (single-pass variance, f32 vector path) -----
    y = x + attn_ref[...] + bvo_ref[...]
    mu = jnp.mean(y, axis=-1, keepdims=True)
    var = jnp.maximum(jnp.mean(y * y, axis=-1, keepdims=True) - mu * mu, 0.0)
    y1 = (y - mu) * jax.lax.rsqrt(var + eps) * g1_ref[...] + beta1_ref[...]

    # ---- feed forward, F axis tiled in static chunks -------------------------
    y1m = y1.astype(mxu_dtype)
    ff_dim = w1_ref.shape[1]
    ff = None
    for c0 in range(0, ff_dim, ff_chunk):
        c1 = min(c0 + ff_chunk, ff_dim)
        h = jnp.dot(y1m, w1_ref[:, c0:c1],
                    preferred_element_type=jnp.float32) + b1_ref[:, c0:c1]
        h = jnp.maximum(h, 0.0).astype(mxu_dtype)
        part = jnp.dot(h, w2_ref[c0:c1, :], preferred_element_type=jnp.float32)
        ff = part if ff is None else ff + part
    ff = ff + b2_ref[...]

    # ---- residual + LayerNorm 2 ----------------------------------------------
    z = y1 + ff
    mu2 = jnp.mean(z, axis=-1, keepdims=True)
    var2 = jnp.maximum(jnp.mean(z * z, axis=-1, keepdims=True) - mu2 * mu2, 0.0)
    o_ref[...] = ((z - mu2) * jax.lax.rsqrt(var2 + eps)
                  * g2_ref[...] + beta2_ref[...]).astype(o_ref.dtype)


def _pick_batch_block(B, S, target_rows=1024):
    """Largest divisor of B with 8-aligned row slab, <= target_rows and >=2 grid
    steps (v7x megacore); falls back gracefully when no such divisor exists."""
    divisors = [d for d in range(1, B + 1) if B % d == 0]
    aligned = lambda d: (d * S) % 8 == 0 or d == B
    cands = [d for d in divisors if d < B and aligned(d) and d * S <= target_rows]
    if cands:
        return max(cands)
    cands = [d for d in divisors if d < B and aligned(d)]
    if cands:
        return min(cands, key=lambda d: d * S)
    return B


def _vmem_limit_bytes():
    """~80% of physical VMEM (v5e/v6e 128 MiB -> ~102 MiB, v7x 64 MiB -> ~51 MiB),
    capped at 110 MiB. Returns None if the hardware query is unavailable."""
    try:
        cap = int(pltpu.get_tpu_info().vmem_capacity_bytes)
    except Exception:
        return None
    return min((cap * 4) // 5, 110 * 1024 * 1024)


def embedded_attention_layer(x, emb, params, dim=-2, *,
                             mxu_dtype=jnp.bfloat16, batch_block=None, ff_chunk=1024):
    """x: (B, S, D) float32, emb: (S, E) float32. Attention over axis `dim`."""
    # glue: transpose(dim, -2) / back (identity for dim=-2)
    x = jnp.swapaxes(x, dim, -2)

    B, S, D = x.shape
    E = emb.shape[-1]
    F = params["w1"].shape[-1]

    # ---- Stage 1: batch-invariant attention matrix A, computed once, bf16 ----
    wqk = jnp.concatenate([params["wq"], params["wk"]], axis=-1).astype(mxu_dtype)
    bqk = jnp.concatenate([params["bq"], params["bk"]], axis=-1)          # f32

    a_mat = pl.pallas_call(
        functools.partial(_attn_matrix_kernel, model_dim=D, mxu_dtype=mxu_dtype),
        out_shape=jax.ShapeDtypeStruct((S, S), mxu_dtype),
        grid_spec=pltpu.PrefetchScalarGridSpec(
            num_scalar_prefetch=0,
            grid=(1,),
            in_specs=[
                pl.BlockSpec((S, E), lambda i: (0, 0)),
                pl.BlockSpec((E, 2 * D), lambda i: (0, 0)),
                pl.BlockSpec((1, 2 * D), lambda i: (0, 0)),
            ],
            out_specs=pl.BlockSpec((S, S), lambda i: (0, 0)),
        ),
        compiler_params=pltpu.CompilerParams(dimension_semantics=("arbitrary",)),
    )(emb, wqk, bqk)

    # ---- Fold Wo into Wv and the biases (softmax rows sum to 1) --------------
    wvo = (params["wv"] @ params["wo"]).astype(mxu_dtype)                 # (D, D) bf16
    bvo = params["bv"] @ params["wo"] + params["bo"]                      # (1, D) f32
    w1 = params["w1"].astype(mxu_dtype)
    w2 = params["w2"].astype(mxu_dtype)

    # ---- Stage 2: row-flattened main kernel ----------------------------------
    if batch_block is None:
        batch_block = _pick_batch_block(B, S)
    assert B % batch_block == 0, "batch_block must divide the batch size"
    assert (batch_block * S) % 8 == 0 or batch_block == B, \
        "batch_block*S must be a multiple of 8 unless the block spans the whole batch"
    rows = batch_block * S
    grid = (B // batch_block,)

    x2 = x.reshape(B * S, D)                       # flatten batch into the row dim

    cp_kwargs = dict(dimension_semantics=("parallel",))
    vmem_limit = _vmem_limit_bytes()
    if vmem_limit is not None:
        cp_kwargs["vmem_limit_bytes"] = vmem_limit
    compiler_params = pltpu.CompilerParams(**cp_kwargs)

    kernel = functools.partial(_layer_kernel, seq_len=S, batch_block=batch_block,
                               ff_chunk=ff_chunk, mxu_dtype=mxu_dtype)
    args = (x2, a_mat,
            wvo, bvo,
            params["g1"], params["beta1"],
            w1, params["b1"], w2, params["b2"],
            params["g2"], params["beta2"])

    def run(single_buffer_consts):
        if single_buffer_consts:
            def const2d(shape):
                # Revisited every grid step, never re-DMA'd -> one buffer is enough.
                return pl.BlockSpec(shape, lambda i: (0, 0),
                                    pipeline_mode=pl.Buffered(buffer_count=1))
        else:
            def const2d(shape):
                return pl.BlockSpec(shape, lambda i: (0, 0))
        return pl.pallas_call(
            kernel,
            out_shape=jax.ShapeDtypeStruct((B * S, D), x.dtype),
            grid_spec=pltpu.PrefetchScalarGridSpec(
                num_scalar_prefetch=0,
                grid=grid,
                in_specs=[
                    pl.BlockSpec((rows, D), lambda i: (i, 0)),   # x rows (flattened batch)
                    const2d((S, S)),                              # A (bf16, batch-invariant)
                    const2d((D, D)), const2d((1, D)),             # Wv@Wo, folded bias
                    const2d((1, D)), const2d((1, D)),             # ln1 gamma, beta
                    const2d((D, F)), const2d((1, F)),             # W1, b1
                    const2d((F, D)), const2d((1, D)),             # W2, b2
                    const2d((1, D)), const2d((1, D)),             # ln2 gamma, beta
                ],
                out_specs=pl.BlockSpec((rows, D), lambda i: (i, 0)),
                scratch_shapes=[pltpu.VMEM((rows, D), jnp.float32)],  # attn scratch
            ),
            compiler_params=compiler_params,
        )(*args)

    try:
        out2 = run(single_buffer_consts=True)
    except Exception:
        # pipeline_mode=pl.Buffered(1) unsupported on this jax build -> default buffering.
        out2 = run(single_buffer_consts=False)

    out = out2.reshape(B, S, D)
    return jnp.swapaxes(out, dim, -2)


def _reference(x, emb, p):
    """Pure-JAX f32 reference of the same forward (for the correctness check)."""
    D = x.shape[-1]
    q = emb @ p["wq"] + p["bq"]
    k = emb @ p["wk"] + p["bk"]
    v = x @ p["wv"] + p["bv"]
    s = (q @ k.T) / jnp.sqrt(jnp.float32(D))
    a = jax.nn.softmax(s, axis=-1)
    attn = a @ v
    attn = attn @ p["wo"] + p["bo"]

    def ln(y, g, b):
        mu = jnp.mean(y, -1, keepdims=True)
        var = jnp.mean((y - mu) ** 2, -1, keepdims=True)
        return (y - mu) / jnp.sqrt(var + 1e-5) * g + b

    y1 = ln(x + attn, p["g1"], p["beta1"])
    ff = jnp.maximum(y1 @ p["w1"] + p["b1"], 0.0) @ p["w2"] + p["b2"]
    return ln(y1 + ff, p["g2"], p["beta2"])


def make_params(key, model_dim, emb_dim, ff_dim):
    ks = jax.random.split(key, 16)
    n = lambda k, s: (0.05 * jax.random.normal(k, s)).astype(jnp.float32)
    return {
        "wq": n(ks[0], (emb_dim, model_dim)),   "bq": n(ks[1], (1, model_dim)),
        "wk": n(ks[2], (emb_dim, model_dim)),   "bk": n(ks[3], (1, model_dim)),
        "wv": n(ks[4], (model_dim, model_dim)), "bv": n(ks[5], (1, model_dim)),
        "wo": n(ks[6], (model_dim, model_dim)), "bo": n(ks[7], (1, model_dim)),
        "g1": jnp.ones((1, model_dim), jnp.float32) + n(ks[8], (1, model_dim)),
        "beta1": n(ks[9], (1, model_dim)),
        "w1": n(ks[10], (model_dim, ff_dim)),   "b1": n(ks[11], (1, ff_dim)),
        "w2": n(ks[12], (ff_dim, model_dim)),   "b2": n(ks[13], (1, model_dim)),
        "g2": jnp.ones((1, model_dim), jnp.float32) + n(ks[14], (1, model_dim)),
        "beta2": n(ks[15], (1, model_dim)),
    }


if __name__ == "__main__":
    B, S, D, E, F = 2, 8, 32, 16, 64   # batch, nodes/seq, model_dim, node_emb_dim, ff_dim
    key = jax.random.PRNGKey(0)
    kx, ke, kp = jax.random.split(key, 3)
    x = jax.random.normal(kx, (B, S, D), dtype=jnp.float32)
    emb = jax.random.normal(ke, (S, E), dtype=jnp.float32)
    params = make_params(kp, D, E, F)

    out = embedded_attention_layer(x, emb, params, dim=-2)
    out = jax.block_until_ready(out)

    ref = jax.vmap(lambda xb: _reference(xb, emb, params))(x)
    # bf16 MXU operands / bf16 A with f32 accumulation -> ~1e-3 level error.
    np.testing.assert_allclose(np.asarray(out), np.asarray(ref), rtol=2e-2, atol=2e-2)

    print("KERNEL_OK")
</pallas_src>

<mosaic_0001>
module attributes {stable_mosaic.version = 11 : i64} {
  func.func @_attn_matrix_kernel(%arg0: i32, %arg1: memref<8x16xf32, #tpu.memory_space<vmem>>, %arg2: memref<16x64xbf16, #tpu.memory_space<vmem>>, %arg3: memref<1x64xf32, #tpu.memory_space<vmem>>, %arg4: memref<8x8xbf16, #tpu.memory_space<vmem>>) attributes {dimension_semantics = [#tpu.dimension_semantics<arbitrary>], iteration_bounds = array<i64: 1>, scalar_prefetch = 0 : i64, scratch_operands = 0 : i64, tpu.core_type = #tpu.core_type<tc>, window_params = [{pipeline_mode = #tpu.pipeline_mode<synchronous>, transform_indices = @transform_0, window_bounds = array<i64: 8, 16>}, {pipeline_mode = #tpu.pipeline_mode<synchronous>, transform_indices = @transform_1, window_bounds = array<i64: 16, 64>}, {pipeline_mode = #tpu.pipeline_mode<synchronous>, transform_indices = @transform_2, window_bounds = array<i64: 1, 64>}, {pipeline_mode = #tpu.pipeline_mode<synchronous>, transform_indices = @transform_3, window_bounds = array<i64: 8, 8>}]} {
    %c0 = arith.constant 0 : index
    %c0_0 = arith.constant 0 : index
    %0 = vector.load %arg1[%c0, %c0_0] : memref<8x16xf32, #tpu.memory_space<vmem>>, vector<8x16xf32>
    %1 = arith.truncf %0 : vector<8x16xf32> to vector<8x16xbf16>
    %c0_1 = arith.constant 0 : index
    %c0_2 = arith.constant 0 : index
    %2 = vector.load %arg2[%c0_1, %c0_2] : memref<16x64xbf16, #tpu.memory_space<vmem>>, vector<16x64xbf16>
    %cst = arith.constant dense<0.000000e+00> : vector<8x64xf32>
    %3 = tpu.matmul %1, %2, %cst {dimension_numbers = #tpu.dot_dimension_numbers<[1], [0], [0], [1], [0, 0, 1, 1], [], []>} : vector<8x16xbf16>, vector<16x64xbf16>, vector<8x64xf32> -> vector<8x64xf32>
    %c0_3 = arith.constant 0 : index
    %c0_4 = arith.constant 0 : index
    %4 = vector.load %arg3[%c0_3, %c0_4] : memref<1x64xf32, #tpu.memory_space<vmem>>, vector<1x64xf32>
    %5 = vector.broadcast %4 : vector<1x64xf32> to vector<8x64xf32>
    %6 = arith.addf %3, %5 : vector<8x64xf32>
    %7 = vector.extract_strided_slice %6 {offsets = [0, 0], sizes = [8, 32], strides = [1, 1]} : vector<8x64xf32> to vector<8x32xf32>
    %8 = vector.extract_strided_slice %6 {offsets = [0, 32], sizes = [8, 32], strides = [1, 1]} : vector<8x64xf32> to vector<8x32xf32>
    %9 = arith.truncf %7 : vector<8x32xf32> to vector<8x32xbf16>
    %10 = arith.truncf %8 : vector<8x32xf32> to vector<8x32xbf16>
    %cst_5 = arith.constant dense<0.000000e+00> : vector<8x8xf32>
    %11 = tpu.matmul %9, %10, %cst_5 {dimension_numbers = #tpu.dot_dimension_numbers<[1], [1], [0], [0], [0, 0, 1, 0], [], []>} : vector<8x32xbf16>, vector<8x32xbf16>, vector<8x8xf32> -> vector<8x8xf32>
    %cst_6 = arith.constant 0.176776692 : f32
    %12 = vector.broadcast %cst_6 : f32 to vector<8x8xf32>
    %13 = arith.mulf %11, %12 : vector<8x8xf32>
    %cst_7 = arith.constant dense<0xFF800000> : vector<8xf32>
    %14 = vector.multi_reduction <maximumf>, %13, %cst_7 [1] : vector<8x8xf32> to vector<8xf32>
    %15 = vector.shape_cast %14 : vector<8xf32> to vector<8x1xf32>
    %16 = vector.broadcast %15 : vector<8x1xf32> to vector<8x8xf32>
    %17 = arith.subf %13, %16 : vector<8x8xf32>
    %18 = math.exp %17 : vector<8x8xf32>
    %cst_8 = arith.constant dense<0.000000e+00> : vector<8xf32>
    %19 = vector.multi_reduction <add>, %18, %cst_8 [1] : vector<8x8xf32> to vector<8xf32>
    %20 = vector.shape_cast %19 : vector<8xf32> to vector<8x1xf32>
    %21 = vector.broadcast %20 : vector<8x1xf32> to vector<8x8xf32>
    %22 = arith.divf %18, %21 : vector<8x8xf32>
    %23 = arith.truncf %22 : vector<8x8xf32> to vector<8x8xbf16>
    %c0_9 = arith.constant 0 : index
    %c0_10 = arith.constant 0 : index
    %24 = vector.load %arg4[%c0_9, %c0_10] : memref<8x8xbf16, #tpu.memory_space<vmem>>, vector<8x8xbf16>
    tpu.vector_store %arg4[%c0_9, %c0_10], %23 {strides = array<i32>} : memref<8x8xbf16, #tpu.memory_space<vmem>>, vector<8x8xbf16>,
    return
  }
  func.func @transform_0(%arg0: i32) -> (i32, i32) {
    %c0_i32 = arith.constant 0 : i32
    %c0_i32_0 = arith.constant 0 : i32
    %c0_i32_1 = arith.constant 0 : i32
    return %c0_i32, %c0_i32_0 : i32, i32
  }
  func.func @transform_1(%arg0: i32) -> (i32, i32) {
    %c0_i32 = arith.constant 0 : i32
    %c0_i32_0 = arith.constant 0 : i32
    %c0_i32_1 = arith.constant 0 : i32
    return %c0_i32, %c0_i32_0 : i32, i32
  }
  func.func @transform_2(%arg0: i32) -> (i32, i32) {
    %c0_i32 = arith.constant 0 : i32
    %c0_i32_0 = arith.constant 0 : i32
    %c0_i32_1 = arith.constant 0 : i32
    return %c0_i32, %c0_i32_0 : i32, i32
  }
  func.func @transform_3(%arg0: i32) -> (i32, i32) {
    %c0_i32 = arith.constant 0 : i32
    %c0_i32_0 = arith.constant 0 : i32
    %c0_i32_1 = arith.constant 0 : i32
    return %c0_i32, %c0_i32_0 : i32, i32
  }
}

</mosaic_0001>

<llo_original>
// kernel: tpu_custom_call.1
$region0: #{tpu_custom_call.1}
  #allocation0 [shape = 'u32[]', space=smem, size = 0x4, offset = 0x4, fixed_abs, tag = 'smem constant byte address 0x4 - core index']
  #allocation1 [shape = 'u32[144,128]{1,0:T(1,128)}', space=vmem, size = 0x12000, scoped, tag = 'internal scratch']
  %s0 = inlined_call_operand.hbm [shape: f32[8,16], index: 0, kind: input, shape index: {}]
  %s1 = inlined_call_operand.hbm [shape: bf16[16,64], index: 1, kind: input, shape index: {}]
  %s2 = inlined_call_operand.vmem [shape: f32[1,64], index: 2, kind: input, shape index: {}]
  %s3 = inlined_call_operand.hbm [shape: bf16[8,8], index: 3, kind: output, shape index: {}]
  %s4 = sld [smem:[#allocation0]]
  $region30: #{tpu_custom_call.1} parent=0
    _
  %s6 = ssub.s32 1, %s4
  %s7 = scalar_select 0, %s6, %s4
  $region1: #{tpu_custom_call.1} parent=0
    #allocation2 [shape = 'u8[4096]{0}', space=vmem, size = 0x1000, scoped, tag = 'input window, operand 0, single buffered']
    #allocation3 [shape = 's32[1]{0}', space=sflag, size = 0x4, scoped, tag = 'scoped memory for tpu_custom_call.1']
    #allocation4 [shape = 's32[1]{0}', space=sflag, size = 0x4, scoped, tag = 'scoped memory for tpu_custom_call.1']
    #allocation5 [shape = 'u8[4096]{0}', space=vmem, size = 0x1000, scoped, tag = 'input window, operand 1, single buffered']
    #allocation6 [shape = 's32[1]{0}', space=sflag, size = 0x4, scoped, tag = 'scoped memory for tpu_custom_call.1']
    #allocation7 [shape = 'u8[2048]{0}', space=vmem, size = 0x800, scoped, tag = 'output window, operand 0, single buffered']
    %8 = vsyncpa [#allocation3], 0
    %9 = vsyncpa [#allocation6], 0
    %10 = vsyncpa [#allocation4], 0
    // Predicated region
    $region2: #{tpu_custom_call.1} parent=1 // pred_check
      _
    $region3: #{tpu_custom_call.1} parent=1 // pred_check_branch
      %12 = sbr.rel (0) target = $region5
    $region4: #{tpu_custom_call.1} parent=1 // pred_region
      %s14 = ssub.s32 128, 128
      %15 = vsyncadd [#allocation3], %s14
      %s17 = sshll.u32 [#allocation2], 4
      %s18 = int_to_ptr.vmem [resolvable:$true] %s17
      %20 = dma.hbm_to_vmem [thread:$0]  %s0, 128, %s18, [#allocation3]
    $region5: #{tpu_custom_call.1} parent=1 // pred_fallthru
      _
    // Predicated region
    $region6: #{tpu_custom_call.1} parent=1 // pred_check
      _
    $region7: #{tpu_custom_call.1} parent=1 // pred_check_branch
      %22 = sbr.rel (0) target = $region9
    $region8: #{tpu_custom_call.1} parent=1 // pred_region
      %s24 = ssub.s32 128, 128
      %25 = vsyncadd [#allocation6], %s24
      %s26 = sshll.u32 [#allocation5], 4
      %s27 = int_to_ptr.vmem [resolvable:$true] %s26
      %32 = dma.hbm_to_vmem [thread:$0]  %s1, 128, %s27, [#allocation6], 64, 64, 4
    $region9: #{tpu_custom_call.1} parent=1 // pred_fallthru
      _
    // Predicated region
    $region10: #{tpu_custom_call.1} parent=1 // pred_check
      _
    $region11: #{tpu_custom_call.1} parent=1 // pred_check_branch
      %34 = sbr.rel (0) target = $region13
    $region12: #{tpu_custom_call.1} parent=1 // pred_region
      _
    $region13: #{tpu_custom_call.1} parent=1 // pred_fallthru
      _
    // Predicated region
    $region14: #{tpu_custom_call.1} parent=1 // pred_check
      _
    $region15: #{tpu_custom_call.1} parent=1 // pred_check_branch
      %36 = sbr.rel (0) target = $region17
    $region16: #{tpu_custom_call.1} parent=1 // pred_region
      %37 = dma.done [#allocation3], 128
    $region17: #{tpu_custom_call.1} parent=1 // pred_fallthru
      _
    // Predicated region
    $region18: #{tpu_custom_call.1} parent=1 // pred_check
      _
    $region19: #{tpu_custom_call.1} parent=1 // pred_check_branch
      %39 = sbr.rel (0) target = $region21
    $region20: #{tpu_custom_call.1} parent=1 // pred_region
      %40 = dma.done [#allocation6], 128
    $region21: #{tpu_custom_call.1} parent=1 // pred_fallthru
      _
    %v42 = vld [vmem:[#allocation2] sm:$0xff]
    %v43 = vpack.c.bf16 %v42, %v42
    %v44 = vld [vmem:[#allocation5] sm:$0xf]
    %v45 = vld [vmem:[#allocation5 + $0x4] sm:$0xf]
    %v46 = vld [vmem:[%s2] sm:$0x1]
    %v48 = vlaneseq
    %v49 = vshrl.u32 %v48, 7
    %v50 = vsub.s32 0, %v49
    %v51 = vrot.slane %v46, %v50
    %v55 = vunpack.c.l.b16 %v44
    %v56 = vunpack.c.l.b16 %v45
    %v57 = vpack.c.b16 %v56, %v55
    %vm59 = vcmask 130048
    %v61 = vsel %vm59, %v43, 0
    %63 = vmatprep.subr.bf16.mxu0 0
    %64 = vmatpush1.bf16.msra.mxu0 %v57
    %65 = vmatprep.subr.bf16.mxu0 0
    %66 = vmatpush1.bf16.msra.mxu0 0
    %67 = vmatprep.subr.bf16.mxu0 0
    %68 = vmatpush1.bf16.msra.mxu0 0
    %69 = vmatprep.subr.bf16.mxu0 0
    %70 = vmatpush1.bf16.msra.mxu0 0
    %71 = vmatprep.subr.bf16.mxu0 0
    %72 = vmatpush1.bf16.msra.mxu0 0
    %73 = vmatprep.subr.bf16.mxu0 0
    %74 = vmatpush1.bf16.msra.mxu0 0
    %75 = vmatprep.subr.bf16.mxu0 0
    %76 = vmatpush1.bf16.msra.mxu0 0
    %77 = vmatprep.subr.bf16.mxu0 0
    %78 = vmatpush1.bf16.msra.mxu0 0
    %79 = vmatprep.subr.bf16.mxu0 0
    %80 = vmatpush1.bf16.msra.mxu0 0
    %81 = vmatprep.subr.bf16.mxu0 0
    %82 = vmatpush1.bf16.msra.mxu0 0
    %83 = vmatprep.subr.bf16.mxu0 0
    %84 = vmatpush1.bf16.msra.mxu0 0
    %85 = vmatprep.subr.bf16.mxu0 0
    %86 = vmatpush1.bf16.msra.mxu0 0
    %87 = vmatprep.subr.bf16.mxu0 0
    %88 = vmatpush1.bf16.msra.mxu0 0
    %89 = vmatprep.subr.bf16.mxu0 0
    %90 = vmatpush1.bf16.msra.mxu0 0
    %91 = vmatprep.subr.bf16.mxu0 0
    %92 = vmatpush1.bf16.msra.mxu0 0
    %93 = vmatprep.subr.bf16.mxu0 0
    %94 = vmatpush1.bf16.msra.mxu0 0
    %95 = vmatprep.mubr.bf16.mxu0 0
    %96 = vmatmul.mubr.bf16.gmra.mrb[0].mxu0 %v61
    %v97 = vpop.f32.mrb[0].mxu0
    %v98 = vadd.f32 %v51, %v97
    %v99 = vpop.f32.mrb[0].mxu0
    %v100 = vpop.f32.mrb[0].mxu0
    %v101 = vpop.f32.mrb[0].mxu0
    %102 = vdwg.mxu0
    %v103 = vpack.c.bf16 %v98, %v98
    %105 = vrot.lane.b32.xlu0 %v103, 96
    %v106 = vpop.permute.xlu0 %105
    %vm107 = vcmask 261120
    %v109 = vsel %vm107, %v103, 0
    %v112 = vsel %vm107, %v106, 0
    %114 = vmatprep.subr.bf16.mxu0 0
    %115 = vmatpush1.bf16.xpose.msra.mxu0 %v112
    %116 = vmatprep.subr.bf16.mxu0 0
    %117 = vmatpush1.bf16.xpose.msra.mxu0 0
    %118 = vmatprep.subr.bf16.mxu0 0
    %119 = vmatpush1.bf16.xpose.msra.mxu0 0
    %120 = vmatprep.subr.bf16.mxu0 0
    %121 = vmatpush1.bf16.xpose.msra.mxu0 0
    %122 = vmatprep.subr.bf16.mxu0 0
    %123 = vmatpush1.bf16.xpose.msra.mxu0 0
    %124 = vmatprep.subr.bf16.mxu0 0
    %125 = vmatpush1.bf16.xpose.msra.mxu0 0
    %126 = vmatprep.subr.bf16.mxu0 0
    %127 = vmatpush1.bf16.xpose.msra.mxu0 0
    %128 = vmatprep.subr.bf16.mxu0 0
    %129 = vmatpush1.bf16.xpose.msra.mxu0 0
    %130 = vmatprep.subr.bf16.mxu0 0
    %131 = vmatpush1.bf16.xpose.msra.mxu0 0
    %132 = vmatprep.subr.bf16.mxu0 0
    %133 = vmatpush1.bf16.xpose.msra.mxu0 0
    %134 = vmatprep.subr.bf16.mxu0 0
    %135 = vmatpush1.bf16.xpose.msra.mxu0 0
    %136 = vmatprep.subr.bf16.mxu0 0
    %137 = vmatpush1.bf16.xpose.msra.mxu0 0
    %138 = vmatprep.subr.bf16.mxu0 0
    %139 = vmatpush1.bf16.xpose.msra.mxu0 0
    %140 = vmatprep.subr.bf16.mxu0 0
    %141 = vmatpush1.bf16.xpose.msra.mxu0 0
    %142 = vmatprep.subr.bf16.mxu0 0
    %143 = vmatpush1.bf16.xpose.msra.mxu0 0
    %144 = vmatprep.subr.bf16.mxu0 0
    %145 = vmatpush1.bf16.xpose.msra.mxu0 0
    %146 = vmatprep.mubr.bf16.mxu0 0
    %147 = vmatmul.mubr.bf16.gmra.mrb[0].mxu0 %v109
    %v148 = vpop.f32.mrb[0].mxu0
    %v149 = vadd.f32 0.0, %v148
    %v150 = vpop.f32.mrb[0].mxu0
    %v151 = vpop.f32.mrb[0].mxu0
    %v152 = vpop.f32.mrb[0].mxu0
    %153 = vdwg.mxu0
    %v154 = vmul.f32 %v149, 0.17677669
    %vm155 = vcmask 64512
    %v156 = vsel %vm155, %v154, -inf
    %157 = vmax.xlane.f32.xlu0 %v156
    %v158 = vpop.xlane.xlu0 %157
    %v159 = vsub.f32 %v154, %v158
    %v160 = vmul.f32 %v159, 1.442695
    %v161 = vpow.pop %v160
    %v162 = vsel %vm155, %v161, 0.0
    %163 = vadd.xlane.f32.xlu0 %v162
    %v164 = vpop.xlane.xlu0 %163
    %v165 = vrcp.pop %v164
    %v166 = vmul.f32 %v161, %v165
    %v167 = vpack.c.bf16 %v166, %v166
    %vm168 = vcmask 60416
    %169 = vst.msk [vmem:[#allocation7] sm:$0xf] %vm168, %v167
    // Predicated region
    $region22: #{tpu_custom_call.1} parent=1 // pred_check
      _
    $region23: #{tpu_custom_call.1} parent=1 // pred_check_branch
      %171 = sbr.rel (0) target = $region25
    $region24: #{tpu_custom_call.1} parent=1 // pred_region
      %s173 = ssub.s32 64, 64
      %174 = vsyncadd [#allocation4], %s173
      %s176 = sshll.u32 [#allocation7], 4
      %s177 = int_to_ptr.vmem [resolvable:$true] %s176
      %179 = dma.vmem_to_hbm [thread:$0]  %s177, 64, %s3, [#allocation4]
    $region25: #{tpu_custom_call.1} parent=1 // pred_fallthru
      _
    // Predicated region
    $region26: #{tpu_custom_call.1} parent=1 // pred_check
      _
    $region27: #{tpu_custom_call.1} parent=1 // pred_check_branch
      %181 = sbr.rel (0) target = $region29
    $region28: #{tpu_custom_call.1} parent=1 // pred_region
      %182 = dma.done [#allocation4], 64
    $region29: #{tpu_custom_call.1} parent=1 // pred_fallthru
      _
    %183 = vsyncpa [#allocation3], 1
    %184 = vsyncpa [#allocation6], 1
    %185 = vsyncpa [#allocation4], 1

</llo_original>
